<compile_context>
chip_gen: v7x
topology: tpu7x:2x2x1
jax: 0.10.0
libtpu: 0.0.40
codegen_flags: <defaults>
</compile_context>

<pallas_src>
import functools

import jax
import jax.numpy as jnp
import numpy as np
from jax.experimental import pallas as pl
from jax.experimental.pallas import tpu as pltpu


# ----------------------------- Pallas kernel ------------------------------


def _ripple_kernel(item_ref, v_ref, head_ref, tail_ref, seg_ref, out_ref, *, H, M):
    """One batch tile (TB users/items) per grid step.

    item_ref : (TB, dim)      f32   item embeddings
    v_ref    : (TB, H*M*dim)  bf16  v[b,(h,m),j] = sum_i item[b,i] * R_{b,h,m}[i,j]
    head_ref : (TB, H*M*dim)  bf16  packed head embeddings
    tail_ref : (TB, H*M*dim)  bf16  packed tail embeddings
    seg_ref  : (H*M*dim, H*M) bf16  segment-sum selector, seg[k,g] = [k//dim == g]
    out_ref  : (1, 1, TB)     f32   sigmoid predictions (lane-dense row)
    """
    HM = H * M
    seg = seg_ref[...]                                            # (HMD, HM) bf16

    # hRv[b, g] = sum_j v[b,g,j] * head[b,g,j]   (segment dot via one MXU matmul)
    vh = v_ref[...] * head_ref[...]                               # (TB, HMD) bf16
    hRv = jnp.dot(vh, seg, preferred_element_type=jnp.float32)    # (TB, HM)  f32

    # Per-hop softmax over the M memories (H, M small & static).
    pi_chunks = []
    for h in range(H):
        s = hRv[:, h * M:(h + 1) * M]                             # (TB, M)
        e = jnp.exp(s - jnp.max(s, axis=-1, keepdims=True))
        den = jnp.sum(e, axis=-1, keepdims=True)
        pi_chunks.append(e * pl.reciprocal(den, approx=True))
    pi = jnp.concatenate(pi_chunks, axis=-1)                      # (TB, HM) f32

    # w[b, g] = sum_j tail[b,g,j] * item[b,j]    (second segment dot)
    item = item_ref[...]                                          # (TB, dim) f32
    item_t = jnp.concatenate([item] * HM, axis=-1)                # (TB, HMD) f32
    tw = (tail_ref[...].astype(jnp.float32) * item_t).astype(jnp.bfloat16)
    w = jnp.dot(tw, seg, preferred_element_type=jnp.float32)      # (TB, HM)  f32

    # logit[b] = sum_g pi[b,g] * w[b,g]  == <o_b, item_b>  ;  stable sigmoid.
    logit = jnp.sum(pi * w, axis=-1, keepdims=True)               # (TB, 1)
    e = jnp.exp(-jnp.abs(logit))
    pred = jnp.where(logit >= 0, 1.0 / (1.0 + e), e / (1.0 + e))  # (TB, 1) f32

    # Lane-dense writeback: turn the (TB,1) prediction column into a (1,TB) row
    # with a tiny MXU matmul against a diagonal selector (one unmasked 128-lane
    # store per tile instead of TB masked 1-lane stores).
    tb = pred.shape[0]
    eye = (jax.lax.broadcasted_iota(jnp.int32, (tb, tb), 0)
           == jax.lax.broadcasted_iota(jnp.int32, (tb, tb), 1)).astype(jnp.float32)
    ones_row = jnp.ones((1, tb), dtype=jnp.float32)
    out_ref[0] = jnp.dot(ones_row, pred * eye,
                         preferred_element_type=jnp.float32)      # (1, TB)


# -------------------------- tiling / sizing helpers -------------------------


def _vmem_capacity_bytes():
    try:
        return int(pltpu.get_tpu_info().vmem_capacity_bytes)
    except Exception:
        return 64 << 20          # v7x has the smallest VMEM; be conservative.


def _pick_block_batch(B, H, M, dim, vmem_cap):
    """Batch-tile size TB (multiple of 16 for bf16 sublane packing)."""
    hmd = H * M * dim
    # Per batch-row footprint: double-buffered inputs (item f32 + 3x bf16 HMD
    # streams) plus in-kernel f32 temporaries.  The 2x double-buffer factor is
    # counted here once, so the budget is half of physical VMEM.
    per_row = 2 * (dim * 4 + 3 * hmd * 2) + 8 * hmd * 4
    budget = vmem_cap // 2
    tb = (budget // per_row) // 16 * 16
    tb = int(max(16, min(tb, 128)))
    # Aim for >= 8 grid steps (>= 4 per v7x TensorCore) when the batch allows.
    if B >= 8 * 16:
        tb = min(tb, max(16, (B // 8) // 16 * 16))
    elif B >= 2 * 16:
        tb = min(tb, max(16, (B // 2) // 16 * 16))
    tb = min(tb, max(16, -(-B // 16) * 16))     # never exceed the padded batch
    return int(tb)


# --------------------------------- wrapper ----------------------------------


def ripplenet_forward(ent_emb, rel_emb, items, heads_idx, rels_idx, tails_idx,
                      *, block_b=None):
    """RippleNet forward: sigmoid(<user_repr, item_emb>) per (user, item) pair."""
    B = int(items.shape[0])
    _, H, M = heads_idx.shape
    n_rel, dim, _ = rel_emb.shape
    HM = H * M
    HMD = HM * dim

    vmem_cap = _vmem_capacity_bytes()
    tb = int(block_b) if block_b else _pick_block_batch(B, H, M, dim, vmem_cap)
    bp = pl.cdiv(B, tb) * tb
    num_tiles = bp // tb

    # Pad the cheap int32 index arrays BEFORE the gathers (no extra HBM pass
    # over gathered tensors).  Padded rows use index 0: softmax over them is
    # uniform and the resulting prediction is discarded by the [:B] slice.
    if bp != B:
        pad = bp - B
        items = jnp.pad(items, (0, pad))
        heads_idx = jnp.pad(heads_idx, ((0, pad), (0, 0), (0, 0)))
        rels_idx = jnp.pad(rels_idx, ((0, pad), (0, 0), (0, 0)))
        tails_idx = jnp.pad(tails_idx, ((0, pad), (0, 0), (0, 0)))

    # --- glue: gathers + lane-dense packing (plain JAX) ---------------------
    ent_bf = ent_emb.astype(jnp.bfloat16)
    item_e = ent_emb[items].astype(jnp.float32)                   # (bp, dim)  f32
    head_p = ent_bf[heads_idx].reshape(bp, HMD)                   # (bp, HMD) bf16
    tail_p = ent_bf[tails_idx].reshape(bp, HMD)                   # (bp, HMD) bf16

    # Reassociated bilinear form: itemR[b, r, :] = item_e[b] @ R_r is ONE small
    # MXU matmul over the tiny relation TABLE; gathering rows by rels_idx gives
    # the (bp, HMD) "v" operand (the (dim, B, HMD) rel stream never exists).
    itemR = jnp.einsum("bi,rij->brj", item_e,
                       rel_emb.astype(jnp.float32))               # (bp, n_rel, dim)
    v_p = itemR[jnp.arange(bp)[:, None], rels_idx.reshape(bp, HM), :]
    v_p = v_p.reshape(bp, HMD).astype(jnp.bfloat16)               # (bp, HMD) bf16

    # Segment-sum selector (hoisted out of the grid body): seg[k, g] = [k//dim == g].
    seg = (jnp.arange(HMD, dtype=jnp.int32)[:, None] // dim
           == jnp.arange(HM, dtype=jnp.int32)[None, :]).astype(jnp.bfloat16)

    kernel = functools.partial(_ripple_kernel, H=H, M=M)

    out = pl.pallas_call(
        kernel,
        out_shape=jax.ShapeDtypeStruct((num_tiles, 1, tb), jnp.float32),
        grid_spec=pltpu.PrefetchScalarGridSpec(
            num_scalar_prefetch=0,
            grid=(num_tiles,),
            in_specs=[
                pl.BlockSpec((tb, dim), lambda t: (t, 0)),    # item (f32)
                pl.BlockSpec((tb, HMD), lambda t: (t, 0)),    # v = item.R (bf16)
                pl.BlockSpec((tb, HMD), lambda t: (t, 0)),    # head (bf16)
                pl.BlockSpec((tb, HMD), lambda t: (t, 0)),    # tail (bf16)
                pl.BlockSpec((HMD, HM), lambda t: (0, 0)),    # selector (constant)
            ],
            out_specs=pl.BlockSpec((1, 1, tb), lambda t: (t, 0, 0)),
        ),
        compiler_params=pltpu.CompilerParams(
            dimension_semantics=("parallel",),
            vmem_limit_bytes=int(min(vmem_cap // 2, 64 << 20)),
        ),
    )(item_e, v_p, head_p, tail_p, seg)
    return out.reshape(bp)[:B]


# ------------------------------ JAX reference ------------------------------


def ripplenet_predict_ref(ent_emb, rel_emb, items, heads_idx, rels_idx, tails_idx):
    B, H, M = heads_idx.shape
    item_e = ent_emb[items]                              # (B, dim)
    head_e = ent_emb[heads_idx]                          # (B, H, M, dim)
    rel_e = rel_emb[rels_idx]                            # (B, H, M, dim, dim)
    tail_e = ent_emb[tails_idx]                          # (B, H, M, dim)

    o = jnp.zeros_like(item_e)
    for h in range(H):
        Rh = jnp.einsum("bmij,bmj->bmi", rel_e[:, h], head_e[:, h])
        hRv = jnp.einsum("bmi,bi->bm", Rh, item_e)
        pi = jax.nn.softmax(hRv, axis=1)
        o = o + jnp.einsum("bm,bmd->bd", pi, tail_e[:, h])
    return jax.nn.sigmoid(jnp.sum(o * item_e, axis=1))


# --------------------------------- Driver ----------------------------------


def xavier_uniform(key, shape):
    # PyTorch nn.init.xavier_uniform_: fan_in = shape[1]*prod(shape[2:]),
    # fan_out = shape[0]*prod(shape[2:])
    recep = int(np.prod(shape[2:])) if len(shape) > 2 else 1
    fan_in = shape[1] * recep
    fan_out = shape[0] * recep
    limit = float(np.sqrt(6.0 / (fan_in + fan_out)))
    return jax.random.uniform(key, shape, jnp.float32, -limit, limit)


if __name__ == "__main__":
    # Small, deterministic synthetic setup.
    B = 32         # batch of (user, item) pairs
    H = 2          # number of hops
    M = 8          # ripple-set size per hop
    dim = 32       # embedding dim
    n_entities = 64
    n_rel = 16

    key = jax.random.PRNGKey(0)
    k_ent, k_rel, k_items, k_heads, k_rels, k_tails = jax.random.split(key, 6)

    # Parameters (deterministic xavier-uniform init).
    ent_emb = xavier_uniform(k_ent, (n_entities, dim))
    rel_emb = xavier_uniform(k_rel, (n_rel, dim, dim))

    # Synthetic pairs / ripple sets (ripple_sets[user][h] -> (heads, rels, tails)).
    items = jax.random.randint(k_items, (B,), 0, n_entities, jnp.int32)
    heads_idx = jax.random.randint(k_heads, (B, H, M), 0, n_entities, jnp.int32)
    rels_idx = jax.random.randint(k_rels, (B, H, M), 0, n_rel, jnp.int32)
    tails_idx = jax.random.randint(k_tails, (B, H, M), 0, n_entities, jnp.int32)

    predicts = jax.jit(ripplenet_forward)(ent_emb, rel_emb, items, heads_idx,
                                          rels_idx, tails_idx)
    predicts = jax.block_until_ready(predicts)

    expected = ripplenet_predict_ref(ent_emb, rel_emb, items, heads_idx,
                                     rels_idx, tails_idx)
    expected = jax.block_until_ready(expected)

    # bf16 streams + approx reciprocal -> loosened tolerance (f32 accumulation).
    np.testing.assert_allclose(np.asarray(predicts), np.asarray(expected),
                               rtol=2e-2, atol=2e-2)
    print("KERNEL_OK")
</pallas_src>

<mosaic_0001>
module attributes {stable_mosaic.version = 11 : i64} {
  func.func @_ripple_kernel(%arg0: i32, %arg1: memref<16x32xf32, #tpu.memory_space<vmem>>, %arg2: memref<16x512xbf16, #tpu.memory_space<vmem>>, %arg3: memref<16x512xbf16, #tpu.memory_space<vmem>>, %arg4: memref<16x512xbf16, #tpu.memory_space<vmem>>, %arg5: memref<512x16xbf16, #tpu.memory_space<vmem>>, %arg6: memref<1x1x16xf32, #tpu.memory_space<vmem>>) attributes {dimension_semantics = [#tpu.dimension_semantics<parallel>], iteration_bounds = array<i64: 2>, scalar_prefetch = 0 : i64, scratch_operands = 0 : i64, tpu.core_type = #tpu.core_type<tc>, window_params = [{transform_indices = @transform_0, window_bounds = array<i64: 16, 32>}, {transform_indices = @transform_1, window_bounds = array<i64: 16, 512>}, {transform_indices = @transform_2, window_bounds = array<i64: 16, 512>}, {transform_indices = @transform_3, window_bounds = array<i64: 16, 512>}, {pipeline_mode = #tpu.pipeline_mode<synchronous>, transform_indices = @transform_4, window_bounds = array<i64: 512, 16>}, {transform_indices = @transform_5, window_bounds = array<i64: 1, 1, 16>}]} {
    %c0 = arith.constant 0 : index
    %c0_0 = arith.constant 0 : index
    %0 = vector.load %arg5[%c0, %c0_0] : memref<512x16xbf16, #tpu.memory_space<vmem>>, vector<512x16xbf16>
    %c0_1 = arith.constant 0 : index
    %c0_2 = arith.constant 0 : index
    %1 = vector.load %arg2[%c0_1, %c0_2] : memref<16x512xbf16, #tpu.memory_space<vmem>>, vector<16x512xbf16>
    %c0_3 = arith.constant 0 : index
    %c0_4 = arith.constant 0 : index
    %2 = vector.load %arg3[%c0_3, %c0_4] : memref<16x512xbf16, #tpu.memory_space<vmem>>, vector<16x512xbf16>
    %3 = arith.mulf %1, %2 : vector<16x512xbf16>
    %cst = arith.constant dense<0.000000e+00> : vector<16x16xf32>
    %4 = tpu.matmul %3, %0, %cst {dimension_numbers = #tpu.dot_dimension_numbers<[1], [0], [0], [1], [0, 0, 1, 1], [], []>} : vector<16x512xbf16>, vector<512x16xbf16>, vector<16x16xf32> -> vector<16x16xf32>
    %5 = vector.extract_strided_slice %4 {offsets = [0, 0], sizes = [16, 8], strides = [1, 1]} : vector<16x16xf32> to vector<16x8xf32>
    %cst_5 = arith.constant dense<0xFF800000> : vector<16xf32>
    %6 = vector.multi_reduction <maximumf>, %5, %cst_5 [1] : vector<16x8xf32> to vector<16xf32>
    %7 = vector.shape_cast %6 : vector<16xf32> to vector<16x1xf32>
    %8 = vector.broadcast %7 : vector<16x1xf32> to vector<16x8xf32>
    %9 = arith.subf %5, %8 : vector<16x8xf32>
    %10 = math.exp %9 : vector<16x8xf32>
    %cst_6 = arith.constant dense<0.000000e+00> : vector<16xf32>
    %11 = vector.multi_reduction <add>, %10, %cst_6 [1] : vector<16x8xf32> to vector<16xf32>
    %12 = vector.shape_cast %11 : vector<16xf32> to vector<16x1xf32>
    %13 = tpu.reciprocal %12 {approx = true} : vector<16x1xf32> -> vector<16x1xf32>
    %14 = vector.broadcast %13 : vector<16x1xf32> to vector<16x8xf32>
    %15 = arith.mulf %10, %14 : vector<16x8xf32>
    %16 = vector.extract_strided_slice %4 {offsets = [0, 8], sizes = [16, 8], strides = [1, 1]} : vector<16x16xf32> to vector<16x8xf32>
    %cst_7 = arith.constant dense<0xFF800000> : vector<16xf32>
    %17 = vector.multi_reduction <maximumf>, %16, %cst_7 [1] : vector<16x8xf32> to vector<16xf32>
    %18 = vector.shape_cast %17 : vector<16xf32> to vector<16x1xf32>
    %19 = vector.broadcast %18 : vector<16x1xf32> to vector<16x8xf32>
    %20 = arith.subf %16, %19 : vector<16x8xf32>
    %21 = math.exp %20 : vector<16x8xf32>
    %cst_8 = arith.constant dense<0.000000e+00> : vector<16xf32>
    %22 = vector.multi_reduction <add>, %21, %cst_8 [1] : vector<16x8xf32> to vector<16xf32>
    %23 = vector.shape_cast %22 : vector<16xf32> to vector<16x1xf32>
    %24 = tpu.reciprocal %23 {approx = true} : vector<16x1xf32> -> vector<16x1xf32>
    %25 = vector.broadcast %24 : vector<16x1xf32> to vector<16x8xf32>
    %26 = arith.mulf %21, %25 : vector<16x8xf32>
    %27 = tpu.concatenate %15, %26 in 1 : vector<16x8xf32>, vector<16x8xf32> -> vector<16x16xf32>
    %c0_9 = arith.constant 0 : index
    %c0_10 = arith.constant 0 : index
    %28 = vector.load %arg1[%c0_9, %c0_10] : memref<16x32xf32, #tpu.memory_space<vmem>>, vector<16x32xf32>
    %29 = tpu.concatenate %28, %28, %28, %28, %28, %28, %28, %28, %28, %28, %28, %28, %28, %28, %28, %28 in 1 : vector<16x32xf32>, vector<16x32xf32>, vector<16x32xf32>, vector<16x32xf32>, vector<16x32xf32>, vector<16x32xf32>, vector<16x32xf32>, vector<16x32xf32>, vector<16x32xf32>, vector<16x32xf32>, vector<16x32xf32>, vector<16x32xf32>, vector<16x32xf32>, vector<16x32xf32>, vector<16x32xf32>, vector<16x32xf32> -> vector<16x512xf32>
    %c0_11 = arith.constant 0 : index
    %c0_12 = arith.constant 0 : index
    %30 = vector.load %arg4[%c0_11, %c0_12] : memref<16x512xbf16, #tpu.memory_space<vmem>>, vector<16x512xbf16>
    %31 = arith.extf %30 : vector<16x512xbf16> to vector<16x512xf32>
    %32 = arith.mulf %31, %29 : vector<16x512xf32>
    %33 = arith.truncf %32 : vector<16x512xf32> to vector<16x512xbf16>
    %cst_13 = arith.constant dense<0.000000e+00> : vector<16x16xf32>
    %34 = tpu.matmul %33, %0, %cst_13 {dimension_numbers = #tpu.dot_dimension_numbers<[1], [0], [0], [1], [0, 0, 1, 1], [], []>} : vector<16x512xbf16>, vector<512x16xbf16>, vector<16x16xf32> -> vector<16x16xf32>
    %35 = arith.mulf %27, %34 : vector<16x16xf32>
    %cst_14 = arith.constant dense<0.000000e+00> : vector<16xf32>
    %36 = vector.multi_reduction <add>, %35, %cst_14 [1] : vector<16x16xf32> to vector<16xf32>
    %37 = vector.shape_cast %36 : vector<16xf32> to vector<16x1xf32>
    %38 = math.absf %37 : vector<16x1xf32>
    %cst_15 = arith.constant 0.000000e+00 : f32
    %39 = vector.broadcast %cst_15 : f32 to vector<16x1xf32>
    %40 = arith.subf %39, %38 : vector<16x1xf32>
    %41 = math.exp %40 : vector<16x1xf32>
    %cst_16 = arith.constant 0.000000e+00 : f32
    %42 = vector.broadcast %cst_16 : f32 to vector<16x1xf32>
    %43 = arith.cmpf oge, %37, %42 : vector<16x1xf32>
    %cst_17 = arith.constant 1.000000e+00 : f32
    %44 = vector.broadcast %cst_17 : f32 to vector<16x1xf32>
    %45 = arith.addf %44, %41 : vector<16x1xf32>
    %cst_18 = arith.constant 1.000000e+00 : f32
    %46 = vector.broadcast %cst_18 : f32 to vector<16x1xf32>
    %47 = arith.divf %46, %45 : vector<16x1xf32>
    %cst_19 = arith.constant 1.000000e+00 : f32
    %48 = vector.broadcast %cst_19 : f32 to vector<16x1xf32>
    %49 = arith.addf %48, %41 : vector<16x1xf32>
    %50 = arith.divf %41, %49 : vector<16x1xf32>
    %51 = arith.select %43, %47, %50 : vector<16x1xi1>, vector<16x1xf32>
    %52 = tpu.iota {dimensions = array<i32: 0>} : vector<16x16xi32>
    %53 = tpu.iota {dimensions = array<i32: 1>} : vector<16x16xi32>
    %54 = arith.cmpi eq, %52, %53 : vector<16x16xi32>
    %55 = arith.extui %54 : vector<16x16xi1> to vector<16x16xi32>
    %56 = arith.sitofp %55 : vector<16x16xi32> to vector<16x16xf32>
    %cst_20 = arith.constant 1.000000e+00 : f32
    %57 = vector.broadcast %cst_20 : f32 to vector<1x16xf32>
    %58 = vector.broadcast %51 : vector<16x1xf32> to vector<16x16xf32>
    %59 = arith.mulf %58, %56 : vector<16x16xf32>
    %cst_21 = arith.constant dense<0.000000e+00> : vector<1x16xf32>
    %60 = tpu.matmul %57, %59, %cst_21 {dimension_numbers = #tpu.dot_dimension_numbers<[1], [0], [0], [1], [0, 0, 1, 1], [], []>} : vector<1x16xf32>, vector<16x16xf32>, vector<1x16xf32> -> vector<1x16xf32>
    %c0_22 = arith.constant 0 : index
    %c0_23 = arith.constant 0 : index
    %c0_24 = arith.constant 0 : index
    %61 = vector.load %arg6[%c0_22, %c0_23, %c0_24] : memref<1x1x16xf32, #tpu.memory_space<vmem>>, vector<1x1x16xf32>
    %62 = vector.shape_cast %61 : vector<1x1x16xf32> to vector<1x16xf32>
    %63 = vector.shape_cast %60 : vector<1x16xf32> to vector<1x1x16xf32>
    tpu.vector_store %arg6[%c0_22, %c0_23, %c0_24], %63 {strides = array<i32>} : memref<1x1x16xf32, #tpu.memory_space<vmem>>, vector<1x1x16xf32>,
    return
  }
  func.func @transform_0(%arg0: i32) -> (i32, i32) {
    %c0_i32 = arith.constant 0 : i32
    %c0_i32_0 = arith.constant 0 : i32
    return %arg0, %c0_i32 : i32, i32
  }
  func.func @transform_1(%arg0: i32) -> (i32, i32) {
    %c0_i32 = arith.constant 0 : i32
    %c0_i32_0 = arith.constant 0 : i32
    return %arg0, %c0_i32 : i32, i32
  }
  func.func @transform_2(%arg0: i32) -> (i32, i32) {
    %c0_i32 = arith.constant 0 : i32
    %c0_i32_0 = arith.constant 0 : i32
    return %arg0, %c0_i32 : i32, i32
  }
  func.func @transform_3(%arg0: i32) -> (i32, i32) {
    %c0_i32 = arith.constant 0 : i32
    %c0_i32_0 = arith.constant 0 : i32
    return %arg0, %c0_i32 : i32, i32
  }
  func.func @transform_4(%arg0: i32) -> (i32, i32) {
    %c0_i32 = arith.constant 0 : i32
    %c0_i32_0 = arith.constant 0 : i32
    %c0_i32_1 = arith.constant 0 : i32
    return %c0_i32, %c0_i32_0 : i32, i32
  }
  func.func @transform_5(%arg0: i32) -> (i32, i32, i32) {
    %c0_i32 = arith.constant 0 : i32
    %c0_i32_0 = arith.constant 0 : i32
    %c0_i32_1 = arith.constant 0 : i32
    return %arg0, %c0_i32, %c0_i32_0 : i32, i32, i32
  }
}

</mosaic_0001>

<llo_original>
// kernel: ripplenet_forward.1
$region0: #{ripplenet_forward.1}
  #allocation0 [shape = 'u32[]', space=smem, size = 0x4, offset = 0x4, fixed_abs, tag = 'smem constant byte address 0x4 - core index']
  #allocation1 [shape = 'u32[144,128]{1,0:T(1,128)}', space=vmem, size = 0x12000, scoped, tag = 'internal scratch']
  %s0 = inlined_call_operand.vmem [shape: f32[32,32], index: 0, kind: input, shape index: {}]
  %s1 = inlined_call_operand.vmem [shape: bf16[32,512], index: 1, kind: input, shape index: {}]
  %s2 = inlined_call_operand.vmem [shape: bf16[32,512], index: 2, kind: input, shape index: {}]
  %s3 = inlined_call_operand.vmem [shape: bf16[32,512], index: 3, kind: input, shape index: {}]
  %s4 = inlined_call_operand.vmem [shape: bf16[512,16], index: 4, kind: input, shape index: {}]
  %s5 = inlined_call_operand.vmem [shape: f32[2,1,16], index: 5, kind: output, shape index: {}]
  %s6 = sld [smem:[#allocation0]]
  $region53: #{ripplenet_forward.1} parent=0
    _
  %s8 = ssub.s32 1, %s6
  %s9 = scalar_select 0, %s8, %s6
  loop: start=0, step=1, limit=4
  $region2: #{ripplenet_forward.1} parent=0 // loop_pre_header
    _
  $region3: #{ripplenet_forward.1} parent=0 // loop_header
    %s11 = sphi 0, %s15
    %p12 = scmp.ge.s32.totalorder %s11, 4
    %s21 = sphi 0, %s23
    %s24 = sphi 0, %s21
    %s25 = sphi 0, %s24
    %s41 = sphi 0, %s25
    %s47 = sphi 0, %s49
    %s50 = sphi 0, %s47
    %s51 = sphi 0, %s50
    %s67 = sphi 0, %s51
    %s73 = sphi 0, %s75
    %s76 = sphi 0, %s73
    %s77 = sphi 0, %s76
    %s93 = sphi 0, %s77
    %s99 = sphi 0, %s101
    %s102 = sphi 0, %s99
    %s103 = sphi 0, %s102
    %s119 = sphi 0, %s103
    %s123 = sphi 0, %s123
    %s125 = sphi 0, %s123
    %s126 = sphi 0, %s125
    %s140 = sphi 0, %s126
    %s146 = sphi 0, %s148
    %s149 = sphi 0, %s146
    %s150 = sphi 0, %s149
    %s166 = sphi 0, %s150
  $region4: #{ripplenet_forward.1} parent=0 // loop_header_branch
    %14 = sbr.rel (%p12) target = $region8
  $region5: #{ripplenet_forward.1} parent=0 // loop_body
    %s16 = ssub.s32 %s11, 1
    %s17 = ssub.s32 %s11, 2
    %s18 = sadd.s32 %s11, 1
    %s19 = ssub.s32 %s11, %s18
    %p20 = scmp.eq.s32.totalorder %s19, 0
    %s22 = sadd.s32 %s21, 1
    %s23 = scalar_select %p20, %s21, %s22
    %p26 = pneg %p20
    %p27 = scmp.eq.s32.totalorder %s11, 1
    %p28 = por %p26, %p27
    %p29 = scmp.ne.s32.totalorder %s21, %s24
    %p30 = scmp.eq.s32.totalorder %s11, 0
    %p31 = por %p29, %p30
    %p32 = scmp.ne.s32.totalorder %s21, %s24
    %p33 = scmp.eq.s32.totalorder %s16, 1
    %p34 = por %p32, %p33
    %p35 = scmp.ne.s32.totalorder %s24, %s25
    %p36 = scmp.eq.s32.totalorder %s16, 0
    %p37 = por %p35, %p36
    %p38 = scmp.ne.s32.totalorder %s24, %s25
    %p39 = scmp.eq.s32.totalorder %s17, 1
    %p40 = por %p38, %p39
    %p42 = scmp.ne.s32.totalorder %s25, %s41
    %p43 = scmp.eq.s32.totalorder %s17, 0
    %p44 = por %p42, %p43
    %s45 = ssub.s32 %s11, %s18
    %p46 = scmp.eq.s32.totalorder %s45, 0
    %s48 = sadd.s32 %s47, 1
    %s49 = scalar_select %p46, %s47, %s48
    %p52 = pneg %p46
    %p53 = scmp.eq.s32.totalorder %s11, 1
    %p54 = por %p52, %p53
    %p55 = scmp.ne.s32.totalorder %s47, %s50
    %p56 = scmp.eq.s32.totalorder %s11, 0
    %p57 = por %p55, %p56
    %p58 = scmp.ne.s32.totalorder %s47, %s50
    %p59 = scmp.eq.s32.totalorder %s16, 1
    %p60 = por %p58, %p59
    %p61 = scmp.ne.s32.totalorder %s50, %s51
    %p62 = scmp.eq.s32.totalorder %s16, 0
    %p63 = por %p61, %p62
    %p64 = scmp.ne.s32.totalorder %s50, %s51
    %p65 = scmp.eq.s32.totalorder %s17, 1
    %p66 = por %p64, %p65
    %p68 = scmp.ne.s32.totalorder %s51, %s67
    %p69 = scmp.eq.s32.totalorder %s17, 0
    %p70 = por %p68, %p69
    %s71 = ssub.s32 %s11, %s18
    %p72 = scmp.eq.s32.totalorder %s71, 0
    %s74 = sadd.s32 %s73, 1
    %s75 = scalar_select %p72, %s73, %s74
    %p78 = pneg %p72
    %p79 = scmp.eq.s32.totalorder %s11, 1
    %p80 = por %p78, %p79
    %p81 = scmp.ne.s32.totalorder %s73, %s76
    %p82 = scmp.eq.s32.totalorder %s11, 0
    %p83 = por %p81, %p82
    %p84 = scmp.ne.s32.totalorder %s73, %s76
    %p85 = scmp.eq.s32.totalorder %s16, 1
    %p86 = por %p84, %p85
    %p87 = scmp.ne.s32.totalorder %s76, %s77
    %p88 = scmp.eq.s32.totalorder %s16, 0
    %p89 = por %p87, %p88
    %p90 = scmp.ne.s32.totalorder %s76, %s77
    %p91 = scmp.eq.s32.totalorder %s17, 1
    %p92 = por %p90, %p91
    %p94 = scmp.ne.s32.totalorder %s77, %s93
    %p95 = scmp.eq.s32.totalorder %s17, 0
    %p96 = por %p94, %p95
    %s97 = ssub.s32 %s11, %s18
    %p98 = scmp.eq.s32.totalorder %s97, 0
    %s100 = sadd.s32 %s99, 1
    %s101 = scalar_select %p98, %s99, %s100
    %p104 = pneg %p98
    %p105 = scmp.eq.s32.totalorder %s11, 1
    %p106 = por %p104, %p105
    %p107 = scmp.ne.s32.totalorder %s99, %s102
    %p108 = scmp.eq.s32.totalorder %s11, 0
    %p109 = por %p107, %p108
    %p110 = scmp.ne.s32.totalorder %s99, %s102
    %p111 = scmp.eq.s32.totalorder %s16, 1
    %p112 = por %p110, %p111
    %p113 = scmp.ne.s32.totalorder %s102, %s103
    %p114 = scmp.eq.s32.totalorder %s16, 0
    %p115 = por %p113, %p114
    %p116 = scmp.ne.s32.totalorder %s102, %s103
    %p117 = scmp.eq.s32.totalorder %s17, 1
    %p118 = por %p116, %p117
    %p120 = scmp.ne.s32.totalorder %s103, %s119
    %p121 = scmp.eq.s32.totalorder %s17, 0
    %p122 = por %p120, %p121
    %s124 = sadd.s32 %s123, 1
    %p127 = scmp.eq.s32.totalorder %s11, 1
    %p128 = scmp.ne.s32.totalorder %s123, %s125
    %p129 = scmp.eq.s32.totalorder %s11, 0
    %p130 = por %p128, %p129
    %p131 = scmp.ne.s32.totalorder %s123, %s125
    %p132 = scmp.eq.s32.totalorder %s16, 1
    %p133 = por %p131, %p132
    %p134 = scmp.ne.s32.totalorder %s125, %s126
    %p135 = scmp.eq.s32.totalorder %s16, 0
    %p136 = por %p134, %p135
    %p137 = scmp.ne.s32.totalorder %s125, %s126
    %p138 = scmp.eq.s32.totalorder %s17, 1
    %p139 = por %p137, %p138
    %p141 = scmp.ne.s32.totalorder %s126, %s140
    %p142 = scmp.eq.s32.totalorder %s17, 0
    %p143 = por %p141, %p142
    %s144 = ssub.s32 %s11, %s18
    %p145 = scmp.eq.s32.totalorder %s144, 0
    %s147 = sadd.s32 %s146, 1
    %s148 = scalar_select %p145, %s146, %s147
    %p151 = pneg %p145
    %p152 = scmp.eq.s32.totalorder %s11, 1
    %p153 = por %p151, %p152
    %p154 = scmp.ne.s32.totalorder %s146, %s149
    %p155 = scmp.eq.s32.totalorder %s11, 0
    %p156 = por %p154, %p155
    %p157 = scmp.ne.s32.totalorder %s146, %s149
    %p158 = scmp.eq.s32.totalorder %s16, 1
    %p159 = por %p157, %p158
    %p160 = scmp.ne.s32.totalorder %s149, %s150
    %p161 = scmp.eq.s32.totalorder %s16, 0
    %p162 = por %p160, %p161
    %p163 = scmp.ne.s32.totalorder %s149, %s150
    %p164 = scmp.eq.s32.totalorder %s17, 1
    %p165 = por %p163, %p164
    %p167 = scmp.ne.s32.totalorder %s150, %s166
    %p168 = scmp.eq.s32.totalorder %s17, 0
    %p169 = por %p167, %p168
    %p170 = scmp.le.s32.totalorder 1, %s11
    %p171 = scmp.lt.s32.totalorder %s11, 3
    %p172 = pnand %p170, %p171
    %p173 = pneg %p172
    // Predicated region
    $region9: #{ripplenet_forward.1} parent=5 // pred_check
      _
    $region10: #{ripplenet_forward.1} parent=5 // pred_check_branch
      %175 = sbr.rel (%p172) target = $region12
    $region11: #{ripplenet_forward.1} parent=5 // pred_region
      %s176 = ssub.s32 %s11, 1
      // Predicated region
      $region13: #{ripplenet_forward.1} parent=11 // pred_check
        %p177 = pneg %p136
      $region14: #{ripplenet_forward.1} parent=11 // pred_check_branch
        %179 = sbr.rel (%p177) target = $region16
      $region15: #{ripplenet_forward.1} parent=11 // pred_region
        _
      $region16: #{ripplenet_forward.1} parent=11 // pred_fallthru
        _
    $region12: #{ripplenet_forward.1} parent=5 // pred_fallthru
      _
    %p180 = scmp.lt.s32.totalorder %s11, 2
    // Predicated region
    $region17: #{ripplenet_forward.1} parent=5 // pred_check
      %p181 = pneg %p180
    $region18: #{ripplenet_forward.1} parent=5 // pred_check_branch
      %183 = sbr.rel (%p181) target = $region20
    $region19: #{ripplenet_forward.1} parent=5 // pred_region
      // Predicated region
      $region21: #{ripplenet_forward.1} parent=19 // pred_check
        %p184 = pneg %p31
      $region22: #{ripplenet_forward.1} parent=19 // pred_check_branch
        %186 = sbr.rel (%p184) target = $region24
      $region23: #{ripplenet_forward.1} parent=19 // pred_region
        %s187 = smul.u32 2, %s11
        %p188 = scmp.lt.s32.totalorder %s187, 3
        %s189 = scalar_select %p188, %s187, 3
        %s190 = smul.addr %s189, 8
        %s191 = scalar_lea.vmem %s0, %s190
        %s192 = smul.u32 2, %s11
      $region24: #{ripplenet_forward.1} parent=19 // pred_fallthru
        _
      // Predicated region
      $region25: #{ripplenet_forward.1} parent=19 // pred_check
        %p193 = pneg %p57
      $region26: #{ripplenet_forward.1} parent=19 // pred_check_branch
        %195 = sbr.rel (%p193) target = $region28
      $region27: #{ripplenet_forward.1} parent=19 // pred_region
        %s196 = smul.u32 2, %s11
        %p197 = scmp.lt.s32.totalorder %s196, 3
        %s198 = scalar_select %p197, %s196, 3
        %s199 = smul.addr %s198, 4
        %s200 = smul.addr %s199, 4
        %s201 = scalar_lea.vmem %s1, %s200
        %s202 = smul.u32 2, %s11
      $region28: #{ripplenet_forward.1} parent=19 // pred_fallthru
        _
      // Predicated region
      $region29: #{ripplenet_forward.1} parent=19 // pred_check
        %p203 = pneg %p83
      $region30: #{ripplenet_forward.1} parent=19 // pred_check_branch
        %205 = sbr.rel (%p203) target = $region32
      $region31: #{ripplenet_forward.1} parent=19 // pred_region
        %s206 = smul.u32 2, %s11
        %p207 = scmp.lt.s32.totalorder %s206, 3
        %s208 = scalar_select %p207, %s206, 3
        %s209 = smul.addr %s208, 4
        %s210 = smul.addr %s209, 4
        %s211 = scalar_lea.vmem %s2, %s210
        %s212 = smul.u32 2, %s11
      $region32: #{ripplenet_forward.1} parent=19 // pred_fallthru
        _
      // Predicated region
      $region33: #{ripplenet_forward.1} parent=19 // pred_check
        %p213 = pneg %p109
      $region34: #{ripplenet_forward.1} parent=19 // pred_check_branch
        %215 = sbr.rel (%p213) target = $region36
      $region35: #{ripplenet_forward.1} parent=19 // pred_region
        %s216 = smul.u32 2, %s11
        %p217 = scmp.lt.s32.totalorder %s216, 3
        %s218 = scalar_select %p217, %s216, 3
        %s219 = smul.addr %s218, 4
        %s220 = smul.addr %s219, 4
        %s221 = scalar_lea.vmem %s3, %s220
        %s222 = smul.u32 2, %s11
      $region36: #{ripplenet_forward.1} parent=19 // pred_fallthru
        _
    $region20: #{ripplenet_forward.1} parent=5 // pred_fallthru
      _
    %p223 = scmp.le.s32.totalorder 1, %s11
    %p224 = scmp.lt.s32.totalorder %s11, 3
    %p225 = pnand %p223, %p224
    %p226 = pneg %p225
    // Predicated region
    $region37: #{ripplenet_forward.1} parent=5 // pred_check
      _
    $region38: #{ripplenet_forward.1} parent=5 // pred_check_branch
      %228 = sbr.rel (%p225) target = $region40
    $region39: #{ripplenet_forward.1} parent=5 // pred_region
      %s229 = ssub.s32 %s11, 1
      %s230 = smul.u32 2, %s16
      %p231 = scmp.lt.s32.totalorder %s230, 3
      %s232 = scalar_select %p231, %s230, 3
      %s233 = smul.addr %s232, 8
      %s234 = scalar_lea.vmem %s0, %s233
      %p235 = pneg %p37
      %p236 = pneg %p34
      %s237 = smul.u32 2, %s16
      %p238 = scmp.lt.s32.totalorder %s237, 3
      %s239 = scalar_select %p238, %s237, 3
      %s240 = smul.addr %s239, 4
      %s241 = smul.addr %s240, 4
      %s242 = scalar_lea.vmem %s1, %s241
      %p243 = pneg %p63
      %p244 = pneg %p60
      %s245 = smul.u32 2, %s16
      %p246 = scmp.lt.s32.totalorder %s245, 3
      %s247 = scalar_select %p246, %s245, 3
      %s248 = smul.addr %s247, 4
      %s249 = smul.addr %s248, 4
      %s250 = scalar_lea.vmem %s2, %s249
      %p251 = pneg %p89
      %p252 = pneg %p86
      %s253 = smul.u32 2, %s16
      %p254 = scmp.lt.s32.totalorder %s253, 3
      %s255 = scalar_select %p254, %s253, 3
      %s256 = smul.addr %s255, 4
      %s257 = smul.addr %s256, 4
      %s258 = scalar_lea.vmem %s3, %s257
      %p259 = pneg %p115
      %p260 = pneg %p112
      %p261 = pneg %p136
      %p262 = pneg %p133
      %p263 = pneg %p162
      %p264 = pneg %p159
      %p265 = scmp.lt.s32.totalorder %s16, 1
      %s266 = scalar_select %p265, %s16, 1
      %s267 = scalar_lea.vmem %s5, %s266
      %s268 = smul.u32 2, %s16
      %p269 = scmp.lt.s32.totalorder %s268, 3
      %s270 = scalar_select %p269, %s268, 3
      %s271 = smul.addr %s270, 8
      %s272 = scalar_lea.vmem %s0, %s271
      %s273 = smul.u32 2, %s16
      %s274 = smul.u32 2, %s16
      %p275 = scmp.lt.s32.totalorder %s274, 3
      %s276 = scalar_select %p275, %s274, 3
      %s277 = smul.addr %s276, 4
      %s278 = smul.addr %s277, 4
      %s279 = scalar_lea.vmem %s1, %s278
      %s280 = smul.u32 2, %s16
      %s281 = smul.u32 2, %s16
      %p282 = scmp.lt.s32.totalorder %s281, 3
      %s283 = scalar_select %p282, %s281, 3
      %s284 = smul.addr %s283, 4
      %s285 = smul.addr %s284, 4
      %s286 = scalar_lea.vmem %s2, %s285
      %s287 = smul.u32 2, %s16
      %s288 = smul.u32 2, %s16
      %p289 = scmp.lt.s32.totalorder %s288, 3
      %s290 = scalar_select %p289, %s288, 3
      %s291 = smul.addr %s290, 4
      %s292 = smul.addr %s291, 4
      %s293 = scalar_lea.vmem %s3, %s292
      %s294 = smul.u32 2, %s16
      %p295 = scmp.lt.s32.totalorder %s16, 1
      %s296 = scalar_select %p295, %s16, 1
      %s297 = scalar_lea.vmem %s5, %s296
      %v299 = vld [vmem:[%s4] sm:$0xf]
      %v300 = vld [vmem:[%s4 + $0x4] sm:$0xf]
      %v301 = vld [vmem:[%s4 + $0x8] sm:$0xf]
      %v302 = vld [vmem:[%s4 + $0xc] sm:$0xf]
      %v303 = vld [vmem:[%s4 + $0x10] sm:$0xf]
      %v304 = vld [vmem:[%s4 + $0x14] sm:$0xf]
      %v305 = vld [vmem:[%s4 + $0x18] sm:$0xf]
      %v306 = vld [vmem:[%s4 + $0x1c] sm:$0xf]
      %v307 = vld [vmem:[%s4 + $0x20] sm:$0xf]
      %v308 = vld [vmem:[%s4 + $0x24] sm:$0xf]
      %v309 = vld [vmem:[%s4 + $0x28] sm:$0xf]
      %v310 = vld [vmem:[%s4 + $0x2c] sm:$0xf]
      %v311 = vld [vmem:[%s4 + $0x30] sm:$0xf]
      %v312 = vld [vmem:[%s4 + $0x34] sm:$0xf]
      %v313 = vld [vmem:[%s4 + $0x38] sm:$0xf]
      %v314 = vld [vmem:[%s4 + $0x3c] sm:$0xf]
      %v315 = vld [vmem:[%s4 + $0x40] sm:$0xf]
      %v316 = vld [vmem:[%s4 + $0x44] sm:$0xf]
      %v317 = vld [vmem:[%s4 + $0x48] sm:$0xf]
      %v318 = vld [vmem:[%s4 + $0x4c] sm:$0xf]
      %v319 = vld [vmem:[%s4 + $0x50] sm:$0xf]
      %v320 = vld [vmem:[%s4 + $0x54] sm:$0xf]
      %v321 = vld [vmem:[%s4 + $0x58] sm:$0xf]
      %v322 = vld [vmem:[%s4 + $0x5c] sm:$0xf]
      %v323 = vld [vmem:[%s4 + $0x60] sm:$0xf]
      %v324 = vld [vmem:[%s4 + $0x64] sm:$0xf]
      %v325 = vld [vmem:[%s4 + $0x68] sm:$0xf]
      %v326 = vld [vmem:[%s4 + $0x6c] sm:$0xf]
      %v327 = vld [vmem:[%s4 + $0x70] sm:$0xf]
      %v328 = vld [vmem:[%s4 + $0x74] sm:$0xf]
      %v329 = vld [vmem:[%s4 + $0x78] sm:$0xf]
      %v330 = vld [vmem:[%s4 + $0x7c] sm:$0xf]
      %v331 = vld [vmem:[%s4 + $0x80] sm:$0xf]
      %v332 = vld [vmem:[%s4 + $0x84] sm:$0xf]
      %v333 = vld [vmem:[%s4 + $0x88] sm:$0xf]
      %v334 = vld [vmem:[%s4 + $0x8c] sm:$0xf]
      %v335 = vld [vmem:[%s4 + $0x90] sm:$0xf]
      %v336 = vld [vmem:[%s4 + $0x94] sm:$0xf]
      %v337 = vld [vmem:[%s4 + $0x98] sm:$0xf]
      %v338 = vld [vmem:[%s4 + $0x9c] sm:$0xf]
      %v339 = vld [vmem:[%s4 + $0xa0] sm:$0xf]
      %v340 = vld [vmem:[%s4 + $0xa4] sm:$0xf]
      %v341 = vld [vmem:[%s4 + $0xa8] sm:$0xf]
      %v342 = vld [vmem:[%s4 + $0xac] sm:$0xf]
      %v343 = vld [vmem:[%s4 + $0xb0] sm:$0xf]
      %v344 = vld [vmem:[%s4 + $0xb4] sm:$0xf]
      %v345 = vld [vmem:[%s4 + $0xb8] sm:$0xf]
      %v346 = vld [vmem:[%s4 + $0xbc] sm:$0xf]
      %v347 = vld [vmem:[%s4 + $0xc0] sm:$0xf]
      %v348 = vld [vmem:[%s4 + $0xc4] sm:$0xf]
      %v349 = vld [vmem:[%s4 + $0xc8] sm:$0xf]
      %v350 = vld [vmem:[%s4 + $0xcc] sm:$0xf]
      %v351 = vld [vmem:[%s4 + $0xd0] sm:$0xf]
      %v352 = vld [vmem:[%s4 + $0xd4] sm:$0xf]
      %v353 = vld [vmem:[%s4 + $0xd8] sm:$0xf]
      %v354 = vld [vmem:[%s4 + $0xdc] sm:$0xf]
      %v355 = vld [vmem:[%s4 + $0xe0] sm:$0xf]
      %v356 = vld [vmem:[%s4 + $0xe4] sm:$0xf]
      %v357 = vld [vmem:[%s4 + $0xe8] sm:$0xf]
      %v358 = vld [vmem:[%s4 + $0xec] sm:$0xf]
      %v359 = vld [vmem:[%s4 + $0xf0] sm:$0xf]
      %v360 = vld [vmem:[%s4 + $0xf4] sm:$0xf]
      %v361 = vld [vmem:[%s4 + $0xf8] sm:$0xf]
      %v362 = vld [vmem:[%s4 + $0xfc] sm:$0xf]
      %v363 = vld [vmem:[%s279] sm:$0xff]
      %v364 = vld [vmem:[%s279 + $0x8] sm:$0xff]
      %v365 = vld [vmem:[%s279 + $0x10] sm:$0xff]
      %v366 = vld [vmem:[%s279 + $0x18] sm:$0xff]
      %v367 = vld [vmem:[%s286] sm:$0xff]
      %v368 = vld [vmem:[%s286 + $0x8] sm:$0xff]
      %v369 = vld [vmem:[%s286 + $0x10] sm:$0xff]
      %v370 = vld [vmem:[%s286 + $0x18] sm:$0xff]
      %v371 = vmul.bf16 %v363, %v367
      %v372 = vmul.bf16 %v364, %v368
      %v373 = vmul.bf16 %v365, %v369
      %v374 = vmul.bf16 %v366, %v370
      %v379 = vunpack.c.l.b16 %v371
      %v380 = vunpack.c.h.b16 %v371
      %v381 = vunpack.c.l.b16 %v372
      %v382 = vunpack.c.h.b16 %v372
      %v383 = vunpack.c.l.b16 %v373
      %v384 = vunpack.c.h.b16 %v373
      %v385 = vunpack.c.l.b16 %v374
      %v386 = vunpack.c.h.b16 %v374
      %v387 = vpack.c.b16 %v383, %v379
      %v388 = vpack.c.b16 %v384, %v380
      %v389 = vpack.c.b16 %v385, %v381
      %v390 = vpack.c.b16 %v386, %v382
      %v459 = vunpack.c.l.b16 %v299
      %v460 = vunpack.c.l.b16 %v300
      %v461 = vunpack.c.l.b16 %v301
      %v462 = vunpack.c.l.b16 %v302
      %v463 = vunpack.c.l.b16 %v303
      %v464 = vunpack.c.l.b16 %v304
      %v465 = vunpack.c.l.b16 %v305
      %v466 = vunpack.c.l.b16 %v306
      %v467 = vunpack.c.l.b16 %v307
      %v468 = vunpack.c.l.b16 %v308
      %v469 = vunpack.c.l.b16 %v309
      %v470 = vunpack.c.l.b16 %v310
      %v471 = vunpack.c.l.b16 %v311
      %v472 = vunpack.c.l.b16 %v312
      %v473 = vunpack.c.l.b16 %v313
      %v474 = vunpack.c.l.b16 %v314
      %v475 = vunpack.c.l.b16 %v315
      %v476 = vunpack.c.l.b16 %v316
      %v477 = vunpack.c.l.b16 %v317
      %v478 = vunpack.c.l.b16 %v318
      %v479 = vunpack.c.l.b16 %v319
      %v480 = vunpack.c.l.b16 %v320
      %v481 = vunpack.c.l.b16 %v321
      %v482 = vunpack.c.l.b16 %v322
      %v483 = vunpack.c.l.b16 %v323
      %v484 = vunpack.c.l.b16 %v324
      %v485 = vunpack.c.l.b16 %v325
      %v486 = vunpack.c.l.b16 %v326
      %v487 = vunpack.c.l.b16 %v327
      %v488 = vunpack.c.l.b16 %v328
      %v489 = vunpack.c.l.b16 %v329
      %v490 = vunpack.c.l.b16 %v330
      %v491 = vunpack.c.l.b16 %v331
      %v492 = vunpack.c.l.b16 %v332
      %v493 = vunpack.c.l.b16 %v333
      %v494 = vunpack.c.l.b16 %v334
      %v495 = vunpack.c.l.b16 %v335
      %v496 = vunpack.c.l.b16 %v336
      %v497 = vunpack.c.l.b16 %v337
      %v498 = vunpack.c.l.b16 %v338
      %v499 = vunpack.c.l.b16 %v339
      %v500 = vunpack.c.l.b16 %v340
      %v501 = vunpack.c.l.b16 %v341
      %v502 = vunpack.c.l.b16 %v342
      %v503 = vunpack.c.l.b16 %v343
      %v504 = vunpack.c.l.b16 %v344
      %v505 = vunpack.c.l.b16 %v345
      %v506 = vunpack.c.l.b16 %v346
      %v507 = vunpack.c.l.b16 %v347
      %v508 = vunpack.c.l.b16 %v348
      %v509 = vunpack.c.l.b16 %v349
      %v510 = vunpack.c.l.b16 %v350
      %v511 = vunpack.c.l.b16 %v351
      %v512 = vunpack.c.l.b16 %v352
      %v513 = vunpack.c.l.b16 %v353
      %v514 = vunpack.c.l.b16 %v354
      %v515 = vunpack.c.l.b16 %v355
      %v516 = vunpack.c.l.b16 %v356
      %v517 = vunpack.c.l.b16 %v357
      %v518 = vunpack.c.l.b16 %v358
      %v519 = vunpack.c.l.b16 %v359
      %v520 = vunpack.c.l.b16 %v360
      %v521 = vunpack.c.l.b16 %v361
      %v522 = vunpack.c.l.b16 %v362
      %v523 = vpack.c.b16 %v460, %v459
      %v524 = vpack.c.b16 %v462, %v461
      %v525 = vpack.c.b16 %v464, %v463
      %v526 = vpack.c.b16 %v466, %v465
      %v527 = vpack.c.b16 %v468, %v467
      %v528 = vpack.c.b16 %v470, %v469
      %v529 = vpack.c.b16 %v472, %v471
      %v530 = vpack.c.b16 %v474, %v473
      %v531 = vpack.c.b16 %v476, %v475
      %v532 = vpack.c.b16 %v478, %v477
      %v533 = vpack.c.b16 %v480, %v479
      %v534 = vpack.c.b16 %v482, %v481
      %v535 = vpack.c.b16 %v484, %v483
      %v536 = vpack.c.b16 %v486, %v485
      %v537 = vpack.c.b16 %v488, %v487
      %v538 = vpack.c.b16 %v490, %v489
      %v539 = vpack.c.b16 %v492, %v491
      %v540 = vpack.c.b16 %v494, %v493
      %v541 = vpack.c.b16 %v496, %v495
      %v542 = vpack.c.b16 %v498, %v497
      %v543 = vpack.c.b16 %v500, %v499
      %v544 = vpack.c.b16 %v502, %v501
      %v545 = vpack.c.b16 %v504, %v503
      %v546 = vpack.c.b16 %v506, %v505
      %v547 = vpack.c.b16 %v508, %v507
      %v548 = vpack.c.b16 %v510, %v509
      %v549 = vpack.c.b16 %v512, %v511
      %v550 = vpack.c.b16 %v514, %v513
      %v551 = vpack.c.b16 %v516, %v515
      %v552 = vpack.c.b16 %v518, %v517
      %v553 = vpack.c.b16 %v520, %v519
      %v554 = vpack.c.b16 %v522, %v521
      %587 = vmatprep.subr.bf16.mxu0 0
      %588 = vmatpush1.bf16.msra.mxu0 %v523
      %589 = vmatprep.subr.bf16.mxu0 0
      %590 = vmatpush1.bf16.msra.mxu0 %v524
      %591 = vmatprep.subr.bf16.mxu0 0
      %592 = vmatpush1.bf16.msra.mxu0 %v525
      %593 = vmatprep.subr.bf16.mxu0 0
      %594 = vmatpush1.bf16.msra.mxu0 %v526
      %595 = vmatprep.subr.bf16.mxu0 0
      %596 = vmatpush1.bf16.msra.mxu0 %v527
      %597 = vmatprep.subr.bf16.mxu0 0
      %598 = vmatpush1.bf16.msra.mxu0 %v528
      %599 = vmatprep.subr.bf16.mxu0 0
      %600 = vmatpush1.bf16.msra.mxu0 %v529
      %601 = vmatprep.subr.bf16.mxu0 0
      %602 = vmatpush1.bf16.msra.mxu0 %v530
      %603 = vmatprep.subr.bf16.mxu0 0
      %604 = vmatpush1.bf16.msra.mxu0 %v531
      %605 = vmatprep.subr.bf16.mxu0 0
      %606 = vmatpush1.bf16.msra.mxu0 %v532
      %607 = vmatprep.subr.bf16.mxu0 0
      %608 = vmatpush1.bf16.msra.mxu0 %v533
      %609 = vmatprep.subr.bf16.mxu0 0
      %610 = vmatpush1.bf16.msra.mxu0 %v534
      %611 = vmatprep.subr.bf16.mxu0 0
      %612 = vmatpush1.bf16.msra.mxu0 %v535
      %613 = vmatprep.subr.bf16.mxu0 0
      %614 = vmatpush1.bf16.msra.mxu0 %v536
      %615 = vmatprep.subr.bf16.mxu0 0
      %616 = vmatpush1.bf16.msra.mxu0 %v537
      %617 = vmatprep.subr.bf16.mxu0 0
      %618 = vmatpush1.bf16.msra.mxu0 %v538
      %619 = vmatprep.mubr.bf16.mxu0 %v388
      %620 = vmatmul.mubr.bf16.gmra.mrb[0].mxu0 %v387
      %v621 = vpop.f32.mrb[0].mxu0
      %v622 = vadd.f32 0.0, %v621
      %v623 = vpop.f32.mrb[0].mxu0
      %v624 = vpop.f32.mrb[0].mxu0
      %v625 = vadd.f32 0.0, %v624
      %v626 = vpop.f32.mrb[0].mxu0
      %627 = vdwg.mxu0
      %628 = vmatprep.subr.bf16.mxu0 0
      %629 = vmatpush1.bf16.msra.mxu0 %v539
      %630 = vmatprep.subr.bf16.mxu0 0
      %631 = vmatpush1.bf16.msra.mxu0 %v540
      %632 = vmatprep.subr.bf16.mxu0 0
      %633 = vmatpush1.bf16.msra.mxu0 %v541
      %634 = vmatprep.subr.bf16.mxu0 0
      %635 = vmatpush1.bf16.msra.mxu0 %v542
      %636 = vmatprep.subr.bf16.mxu0 0
      %637 = vmatpush1.bf16.msra.mxu0 %v543
      %638 = vmatprep.subr.bf16.mxu0 0
      %639 = vmatpush1.bf16.msra.mxu0 %v544
      %640 = vmatprep.subr.bf16.mxu0 0
      %641 = vmatpush1.bf16.msra.mxu0 %v545
      %642 = vmatprep.subr.bf16.mxu0 0
      %643 = vmatpush1.bf16.msra.mxu0 %v546
      %644 = vmatprep.subr.bf16.mxu0 0
      %645 = vmatpush1.bf16.msra.mxu0 %v547
      %646 = vmatprep.subr.bf16.mxu0 0
      %647 = vmatpush1.bf16.msra.mxu0 %v548
      %648 = vmatprep.subr.bf16.mxu0 0
      %649 = vmatpush1.bf16.msra.mxu0 %v549
      %650 = vmatprep.subr.bf16.mxu0 0
      %651 = vmatpush1.bf16.msra.mxu0 %v550
      %652 = vmatprep.subr.bf16.mxu0 0
      %653 = vmatpush1.bf16.msra.mxu0 %v551
      %654 = vmatprep.subr.bf16.mxu0 0
      %655 = vmatpush1.bf16.msra.mxu0 %v552
      %656 = vmatprep.subr.bf16.mxu0 0
      %657 = vmatpush1.bf16.msra.mxu0 %v553
      %658 = vmatprep.subr.bf16.mxu0 0
      %659 = vmatpush1.bf16.msra.mxu0 %v554
      %660 = vmatprep.mubr.bf16.mxu0 %v390
      %661 = vmatmul.mubr.bf16.gmra.mrb[0].mxu0 %v389
      %v662 = vpop.f32.mrb[0].mxu0
      %v663 = vadd.f32 %v622, %v662
      %v664 = vpop.f32.mrb[0].mxu0
      %v665 = vpop.f32.mrb[0].mxu0
      %v666 = vadd.f32 %v625, %v665
      %v667 = vpop.f32.mrb[0].mxu0
      %668 = vdwg.mxu0
      %vm669 = vcmask 64512
      %v670 = vsel %vm669, %v663, -inf
      %671 = vmax.xlane.f32.xlu0 %v670
      %v672 = vpop.xlane.xlu0 %671
      %v673 = vsel %vm669, %v666, -inf
      %674 = vmax.xlane.f32.xlu0 %v673
      %v675 = vpop.xlane.xlu0 %674
      %v676 = vsub.f32 %v663, %v672
      %v677 = vsub.f32 %v666, %v675
      %v678 = vmul.f32 %v676, 1.442695
      %v679 = vpow.pop %v678
      %v680 = vmul.f32 %v677, 1.442695
      %v681 = vpow.pop %v680
      %v682 = vsel %vm669, %v679, 0.0
      %683 = vadd.xlane.f32.xlu0 %v682
      %v684 = vpop.xlane.xlu0 %683
      %v685 = vsel %vm669, %v681, 0.0
      %686 = vadd.xlane.f32.xlu0 %v685
      %v687 = vpop.xlane.xlu0 %686
      %v688 = vrcp.pop %v684
      %v689 = vrcp.pop %v687
      %v690 = vmul.f32 %v679, %v688
      %v691 = vmul.f32 %v681, %v689
      %vm692 = vcmask 130112
      %v693 = vsel %vm692, %v663, -inf
      %694 = vmax.xlane.f32.xlu0 %v693
      %v695 = vpop.xlane.xlu0 %694
      %v696 = vsel %vm692, %v666, -inf
      %697 = vmax.xlane.f32.xlu0 %v696
      %v698 = vpop.xlane.xlu0 %697
      %v699 = vsub.f32 %v663, %v695
      %v700 = vsub.f32 %v666, %v698
      %v701 = vmul.f32 %v699, 1.442695
      %v702 = vpow.pop %v701
      %v703 = vmul.f32 %v700, 1.442695
      %v704 = vpow.pop %v703
      %707 = vrot.lane.b32.xlu0 %v702, 120
      %v708 = vpop.permute.xlu0 %707
      %709 = vrot.lane.b32.xlu0 %v704, 120
      %v710 = vpop.permute.xlu0 %709
      %v713 = vsel %vm669, %v708, 0.0
      %714 = vadd.xlane.f32.xlu0 %v713
      %v715 = vpop.xlane.xlu0 %714
      %v716 = vsel %vm669, %v710, 0.0
      %717 = vadd.xlane.f32.xlu0 %v716
      %v718 = vpop.xlane.xlu0 %717
      %v719 = vrcp.pop %v715
      %v720 = vrcp.pop %v718
      %v721 = vmul.f32 %v702, %v719
      %v722 = vmul.f32 %v704, %v720
      %v723 = vsel %vm669, %v690, %v721
      %v724 = vsel %vm669, %v691, %v722
      %v725 = vld [vmem:[%s272] sm:$0xff]
      %v726 = vld [vmem:[%s272 + $0x8] sm:$0xff]
      %729 = vrot.lane.b32.xlu0 %v725, 32
      %v730 = vpop.permute.xlu0 %729
      %731 = vrot.lane.b32.xlu0 %v726, 32
      %v732 = vpop.permute.xlu0 %731
      %735 = vrot.lane.b32.xlu0 %v725, 64
      %v736 = vpop.permute.xlu0 %735
      %737 = vrot.lane.b32.xlu0 %v726, 64
      %v738 = vpop.permute.xlu0 %737
      %741 = vrot.lane.b32.xlu0 %v725, 96
      %v742 = vpop.permute.xlu0 %741
      %743 = vrot.lane.b32.xlu0 %v726, 96
      %v744 = vpop.permute.xlu0 %743
      %vm747 = vcmask 261120
      %v748 = vsel %vm747, %v725, %v730
      %v749 = vsel %vm747, %v726, %v732
      %vm750 = vcmask 523264
      %v751 = vsel %vm750, %v748, %v736
      %v752 = vsel %vm750, %v749, %v738
      %vm753 = vcmask 785408
      %v754 = vsel %vm753, %v751, %v742
      %v755 = vsel %vm753, %v752, %v744
      %v756 = vld [vmem:[%s293] sm:$0xff]
      %v757 = vld [vmem:[%s293 + $0x8] sm:$0xff]
      %v758 = vld [vmem:[%s293 + $0x10] sm:$0xff]
      %v759 = vld [vmem:[%s293 + $0x18] sm:$0xff]
      %v760 = vunpack.c.l.bf16 %v756
      %v761 = vunpack.c.h.bf16 %v756
      %v762 = vunpack.c.l.bf16 %v757
      %v763 = vunpack.c.h.bf16 %v757
      %v764 = vunpack.c.l.bf16 %v758
      %v765 = vunpack.c.h.bf16 %v758
      %v766 = vunpack.c.l.bf16 %v759
      %v767 = vunpack.c.h.bf16 %v759
      %v768 = vmul.f32 %v760, %v754
      %v769 = vmul.f32 %v761, %v754
      %v770 = vmul.f32 %v762, %v754
      %v771 = vmul.f32 %v763, %v754
      %v772 = vmul.f32 %v764, %v755
      %v773 = vmul.f32 %v765, %v755
      %v774 = vmul.f32 %v766, %v755
      %v775 = vmul.f32 %v767, %v755
      %v776 = vpack.c.bf16 %v772, %v768
      %v777 = vpack.c.bf16 %v773, %v769
      %v778 = vpack.c.bf16 %v774, %v770
      %v779 = vpack.c.bf16 %v775, %v771
      %780 = vmatprep.subr.bf16.mxu0 0
      %781 = vmatpush1.bf16.msra.mxu0 %v523
      %782 = vmatprep.subr.bf16.mxu0 0
      %783 = vmatpush1.bf16.msra.mxu0 %v524
      %784 = vmatprep.subr.bf16.mxu0 0
      %785 = vmatpush1.bf16.msra.mxu0 %v525
      %786 = vmatprep.subr.bf16.mxu0 0
      %787 = vmatpush1.bf16.msra.mxu0 %v526
      %788 = vmatprep.subr.bf16.mxu0 0
      %789 = vmatpush1.bf16.msra.mxu0 %v527
      %790 = vmatprep.subr.bf16.mxu0 0
      %791 = vmatpush1.bf16.msra.mxu0 %v528
      %792 = vmatprep.subr.bf16.mxu0 0
      %793 = vmatpush1.bf16.msra.mxu0 %v529
      %794 = vmatprep.subr.bf16.mxu0 0
      %795 = vmatpush1.bf16.msra.mxu0 %v530
      %796 = vmatprep.subr.bf16.mxu0 0
      %797 = vmatpush1.bf16.msra.mxu0 %v531
      %798 = vmatprep.subr.bf16.mxu0 0
      %799 = vmatpush1.bf16.msra.mxu0 %v532
      %800 = vmatprep.subr.bf16.mxu0 0
      %801 = vmatpush1.bf16.msra.mxu0 %v533
      %802 = vmatprep.subr.bf16.mxu0 0
      %803 = vmatpush1.bf16.msra.mxu0 %v534
      %804 = vmatprep.subr.bf16.mxu0 0
      %805 = vmatpush1.bf16.msra.mxu0 %v535
      %806 = vmatprep.subr.bf16.mxu0 0
      %807 = vmatpush1.bf16.msra.mxu0 %v536
      %808 = vmatprep.subr.bf16.mxu0 0
      %809 = vmatpush1.bf16.msra.mxu0 %v537
      %810 = vmatprep.subr.bf16.mxu0 0
      %811 = vmatpush1.bf16.msra.mxu0 %v538
      %812 = vmatprep.mubr.bf16.mxu0 %v777
      %813 = vmatmul.mubr.bf16.gmra.mrb[0].mxu0 %v776
      %v814 = vpop.f32.mrb[0].mxu0
      %v815 = vadd.f32 0.0, %v814
      %v816 = vpop.f32.mrb[0].mxu0
      %v817 = vpop.f32.mrb[0].mxu0
      %v818 = vadd.f32 0.0, %v817
      %v819 = vpop.f32.mrb[0].mxu0
      %820 = vdwg.mxu0
      %821 = vmatprep.subr.bf16.mxu0 0
      %822 = vmatpush1.bf16.msra.mxu0 %v539
      %823 = vmatprep.subr.bf16.mxu0 0
      %824 = vmatpush1.bf16.msra.mxu0 %v540
      %825 = vmatprep.subr.bf16.mxu0 0
      %826 = vmatpush1.bf16.msra.mxu0 %v541
      %827 = vmatprep.subr.bf16.mxu0 0
      %828 = vmatpush1.bf16.msra.mxu0 %v542
      %829 = vmatprep.subr.bf16.mxu0 0
      %830 = vmatpush1.bf16.msra.mxu0 %v543
      %831 = vmatprep.subr.bf16.mxu0 0
      %832 = vmatpush1.bf16.msra.mxu0 %v544
      %833 = vmatprep.subr.bf16.mxu0 0
      %834 = vmatpush1.bf16.msra.mxu0 %v545
      %835 = vmatprep.subr.bf16.mxu0 0
      %836 = vmatpush1.bf16.msra.mxu0 %v546
      %837 = vmatprep.subr.bf16.mxu0 0
      %838 = vmatpush1.bf16.msra.mxu0 %v547
      %839 = vmatprep.subr.bf16.mxu0 0
      %840 = vmatpush1.bf16.msra.mxu0 %v548
      %841 = vmatprep.subr.bf16.mxu0 0
      %842 = vmatpush1.bf16.msra.mxu0 %v549
      %843 = vmatprep.subr.bf16.mxu0 0
      %844 = vmatpush1.bf16.msra.mxu0 %v550
      %845 = vmatprep.subr.bf16.mxu0 0
      %846 = vmatpush1.bf16.msra.mxu0 %v551
      %847 = vmatprep.subr.bf16.mxu0 0
      %848 = vmatpush1.bf16.msra.mxu0 %v552
      %849 = vmatprep.subr.bf16.mxu0 0
      %850 = vmatpush1.bf16.msra.mxu0 %v553
      %851 = vmatprep.subr.bf16.mxu0 0
      %852 = vmatpush1.bf16.msra.mxu0 %v554
      %853 = vmatprep.mubr.bf16.mxu0 %v779
      %854 = vmatmul.mubr.bf16.gmra.mrb[0].mxu0 %v778
      %v855 = vpop.f32.mrb[0].mxu0
      %v856 = vadd.f32 %v815, %v855
      %v857 = vpop.f32.mrb[0].mxu0
      %v858 = vpop.f32.mrb[0].mxu0
      %v859 = vadd.f32 %v818, %v858
      %v860 = vpop.f32.mrb[0].mxu0
      %861 = vdwg.mxu0
      %v862 = vmul.f32 %v723, %v856
      %v863 = vmul.f32 %v724, %v859
      %vm864 = vcmask 130048
      %v865 = vsel %vm864, %v862, 0.0
      %866 = vadd.xlane.f32.xlu0 %v865
      %v867 = vpop.xlane.xlu0 %866
      %v868 = vsel %vm864, %v863, 0.0
      %869 = vadd.xlane.f32.xlu0 %v868
      %v870 = vpop.xlane.xlu0 %869
      %v871 = vand.u32 2147483647, %v867
      %v872 = vand.u32 2147483647, %v870
      %v873 = vsub.f32 0.0, %v871
      %v874 = vsub.f32 0.0, %v872
      %v875 = vmul.f32 %v873, 1.442695
      %v876 = vpow.pop %v875
      %v877 = vmul.f32 %v874, 1.442695
      %v878 = vpow.pop %v877
      %vm879 = vcmp.ge.f32.partialorder %v867, 0.0
      %vm880 = vcmp.ge.f32.partialorder %v870, 0.0
      %v881 = vadd.f32 %v876, 1.0
      %v882 = vadd.f32 %v878, 1.0
      %v883 = vrcp.pop %v881
      %v884 = vmul.f32 1.0, %v883
      %v885 = vrcp.pop %v882
      %v886 = vmul.f32 1.0, %v885
      %v887 = vmul.f32 %v876, %v883
      %v888 = vmul.f32 %v878, %v885
      %v889 = vsel %vm879, %v884, %v887
      %v890 = vsel %vm880, %v886, %v888
      %v891 = vlaneseq
      %v892 = vshrl.u32 %v891, 7
      %v893 = vadd.s32 %v892, 8
      %v894 = vlaneseq
      %v895 = vand.u32 %v894, 127
      %vm896 = vcmp.eq.s32.totalorder %v892, %v895
      %vm897 = vcmp.eq.s32.totalorder %v893, %v895
      %v898 = vsel %vm896, 1, 0
      %v899 = vsel %vm897, 1, 0
      %v900 = vcvt.s32.f32 %v898
      %v901 = vcvt.s32.f32 %v899
      %v902 = vmul.f32 %v889, %v900
      %v903 = vmul.f32 %v890, %v901
      %v905 = vsel %vm864, 1.0, 0
      %907 = vmatprep.subr.mxu0 0.0
      %908 = vmatpush1.msra.mxu0 %v902
      %909 = vmatprep.subr.mxu0 0.0
      %910 = vmatpush1.msra.mxu0 %v903
      %911 = vmatprep.subr.mxu0 0.0
      %912 = vmatpush1.msra.mxu0 0.0
      %913 = vmatprep.subr.mxu0 0.0
      %914 = vmatpush1.msra.mxu0 0.0
      %915 = vmatprep.subr.mxu0 0.0
      %916 = vmatpush1.msra.mxu0 0.0
      %917 = vmatprep.subr.mxu0 0.0
      %918 = vmatpush1.msra.mxu0 0.0
      %919 = vmatprep.subr.mxu0 0.0
      %920 = vmatpush1.msra.mxu0 0.0
      %921 = vmatprep.subr.mxu0 0.0
      %922 = vmatpush1.msra.mxu0 0.0
      %923 = vmatprep.subr.mxu0 0.0
      %924 = vmatpush1.msra.mxu0 0.0
      %925 = vmatprep.subr.mxu0 0.0
      %926 = vmatpush1.msra.mxu0 0.0
      %927 = vmatprep.subr.mxu0 0.0
      %928 = vmatpush1.msra.mxu0 0.0
      %929 = vmatprep.subr.mxu0 0.0
      %930 = vmatpush1.msra.mxu0 0.0
      %931 = vmatprep.subr.mxu0 0.0
      %932 = vmatpush1.msra.mxu0 0.0
      %933 = vmatprep.subr.mxu0 0.0
      %934 = vmatpush1.msra.mxu0 0.0
      %935 = vmatprep.subr.mxu0 0.0
      %936 = vmatpush1.msra.mxu0 0.0
      %937 = vmatprep.subr.mxu0 0.0
      %938 = vmatpush1.msra.mxu0 0.0
      %939 = vmatprep.subr.mxu0 0.0
      %940 = vmatpush1.msra.mxu0 0.0
      %941 = vmatprep.subr.mxu0 0.0
      %942 = vmatpush1.msra.mxu0 0.0
      %943 = vmatprep.subr.mxu0 0.0
      %944 = vmatpush1.msra.mxu0 0.0
      %945 = vmatprep.subr.mxu0 0.0
      %946 = vmatpush1.msra.mxu0 0.0
      %947 = vmatprep.subr.mxu0 0.0
      %948 = vmatpush1.msra.mxu0 0.0
      %949 = vmatprep.subr.mxu0 0.0
      %950 = vmatpush1.msra.mxu0 0.0
      %951 = vmatprep.subr.mxu0 0.0
      %952 = vmatpush1.msra.mxu0 0.0
      %953 = vmatprep.subr.mxu0 0.0
      %954 = vmatpush1.msra.mxu0 0.0
      %955 = vmatprep.subr.mxu0 0.0
      %956 = vmatpush1.msra.mxu0 0.0
      %957 = vmatprep.subr.mxu0 0.0
      %958 = vmatpush1.msra.mxu0 0.0
      %959 = vmatprep.subr.mxu0 0.0
      %960 = vmatpush1.msra.mxu0 0.0
      %961 = vmatprep.subr.mxu0 0.0
      %962 = vmatpush1.msra.mxu0 0.0
      %963 = vmatprep.subr.mxu0 0.0
      %964 = vmatpush1.msra.mxu0 0.0
      %965 = vmatprep.subr.mxu0 0.0
      %966 = vmatpush1.msra.mxu0 0.0
      %967 = vmatprep.subr.mxu0 0.0
      %968 = vmatpush1.msra.mxu0 0.0
      %969 = vmatprep.subr.mxu0 0.0
      %970 = vmatpush1.msra.mxu0 0.0
      %971 = vmatprep.mubr.f32.mxu0 0.0
      %972 = vmatmul.mubr.f32.gmra.mrb[0].mxu0 %v905
      %v973 = vpop.f32.mrb[0].mxu0
      %v974 = vadd.f32 0.0, %v973
      %v975 = vpop.f32.mrb[0].mxu0
      %976 = vdwg.mxu0
      %vm977 = vcmask 122880
      %978 = vst.msk [vmem:[%s297] sm:$0x1] %vm977, %v974
      %p979 = scmp.lt.s32.totalorder %s16, 1
      %s980 = scalar_select %p979, %s16, 1
      %s981 = scalar_lea.vmem %s5, %s980
      // Predicated region
      $region41: #{ripplenet_forward.1} parent=39 // pred_check
        %p982 = pneg %p159
      $region42: #{ripplenet_forward.1} parent=39 // pred_check_branch
        %984 = sbr.rel (%p982) target = $region44
      $region43: #{ripplenet_forward.1} parent=39 // pred_region
        _
      $region44: #{ripplenet_forward.1} parent=39 // pred_fallthru
        _
    $region40: #{ripplenet_forward.1} parent=5 // pred_fallthru
      _
    %p985 = scmp.le.s32.totalorder 2, %s11
    // Predicated region
    $region45: #{ripplenet_forward.1} parent=5 // pred_check
      %p986 = pneg %p985
    $region46: #{ripplenet_forward.1} parent=5 // pred_check_branch
      %988 = sbr.rel (%p986) target = $region48
    $region47: #{ripplenet_forward.1} parent=5 // pred_region
      %s989 = ssub.s32 %s11, 2
      // Predicated region
      $region49: #{ripplenet_forward.1} parent=47 // pred_check
        %p990 = pneg %p165
      $region50: #{ripplenet_forward.1} parent=47 // pred_check_branch
        %992 = sbr.rel (%p990) target = $region52
      $region51: #{ripplenet_forward.1} parent=47 // pred_region
        %p993 = scmp.lt.s32.totalorder %s17, 1
        %s994 = scalar_select %p993, %s17, 1
        %s995 = scalar_lea.vmem %s5, %s994
      $region52: #{ripplenet_forward.1} parent=47 // pred_fallthru
        _
    $region48: #{ripplenet_forward.1} parent=5 // pred_fallthru
      _
  $region6: #{ripplenet_forward.1} parent=0 // loop_footer
    %s15 = sadd.s32 1, %s11
  $region7: #{ripplenet_forward.1} parent=0 // loop_footer_branch
    %10 = sbr.rel target = $region3
  $region8: #{ripplenet_forward.1} parent=0 // loop_exit
    _

</llo_original>
